<compile_context>
chip_gen: v7x
topology: tpu7x:2x2x1
jax: 0.10.0
libtpu: 0.0.40
codegen_flags: <defaults>
</compile_context>

<pallas_src>
import math

import jax
import jax.numpy as jnp
from jax.experimental import pallas as pl
from jax.experimental.pallas import tpu as pltpu


def _round_up(x, m):
    return ((x + m - 1) // m) * m


# ------------------------------ Pallas kernel -------------------------------

def _swiglu_kernel(x_ref, w1_ref, w2_ref, b1_ref, b2_ref, o_ref):
    # x: [tm, Dp]; w1/w2: [Dp, tn]; b1/b2: [1, tn]; o: [tm, tn].
    x = x_ref[...]
    # Two half-width MXU dots (bf16/f32 operands, f32 accumulation). Keeping
    # them separate means the f32 temporaries are only [tm, tn] each.
    h1 = jnp.dot(x, w1_ref[...], preferred_element_type=jnp.float32) + b1_ref[...]
    h2 = jnp.dot(x, w2_ref[...], preferred_element_type=jnp.float32) + b2_ref[...]
    # swish(fc1(x)) * sigmoid(fc2(x)); sigmoid/exp go to the EUP. Epilogue in
    # f32, single cast at the final (lane-dense) store.
    o_ref[...] = ((h1 * jax.nn.sigmoid(h1)) * jax.nn.sigmoid(h2)).astype(o_ref.dtype)


# --------------------------- parameter pre-packing --------------------------

def pack_swiglu_params(w1, b1, w2, b2, compute_dtype=None):
    """Pad the channel axis to a multiple of 128 and cast ONCE (not per call).

    w1, w2: [D, D] stored input-major (y = x @ w + b); b1, b2: [D].
    """
    D = w1.shape[0]
    Dp = _round_up(D, 128)
    dt = jnp.dtype(compute_dtype) if compute_dtype is not None else w1.dtype
    pad = Dp - D
    w1p = jnp.pad(w1.astype(dt), ((0, pad), (0, pad)))
    w2p = jnp.pad(w2.astype(dt), ((0, pad), (0, pad)))
    b1p = jnp.pad(b1.astype(dt), ((0, pad),)).reshape(1, Dp)
    b2p = jnp.pad(b2.astype(dt), ((0, pad),)).reshape(1, Dp)
    return {"w1": w1p, "w2": w2p, "b1": b1p, "b2": b2p, "d": D}


# ------------------------------ tiling heuristics ----------------------------

_VMEM_TILE_BUDGET = 40 * 1024 * 1024   # stay well under v7x's 64 MiB physical VMEM


def _tile_footprint_bytes(tm, tn, Dp, in_isz, out_isz):
    db = 2                                   # default double-buffering per operand
    act = tm * Dp * in_isz                   # x row tile
    wts = 2 * Dp * tn * in_isz               # W1 + W2 column tiles
    bia = 2 * tn * in_isz
    out = tm * tn * out_isz
    scratch = 3 * tm * tn * 4                # f32 h1 / h2 / product temporaries
    return db * (act + wts + bia + out) + scratch


def _pick_tiles(R, Dp, in_isz, out_isz, tn_hint=512):
    tn = max(128, min(Dp, _round_up(tn_hint, 128)))
    candidates = (512, 256, 128, 64, 32, 16, 8)
    fitting = [(tm, _round_up(R, tm)) for tm in candidates
               if _tile_footprint_bytes(tm, tn, Dp, in_isz, out_isz) <= _VMEM_TILE_BUDGET]
    if not fitting:
        if tn > 128:
            # Shrink the weight column tile (streams more, same correctness).
            return _pick_tiles(R, Dp, in_isz, out_isz, tn_hint=tn // 2)
        fitting = [(8, _round_up(R, 8))]     # last-resort fallback
    # Largest row tile whose padding waste is <= 1/8 of the work; otherwise the
    # candidate with the least wasted rows (ties -> larger tm).
    for tm, Rp in fitting:
        if (Rp - R) <= Rp // 8:
            break
    else:
        tm, Rp = min(fitting, key=lambda t: (t[1], -t[0]))
    # v7x megacore (2 TensorCores): give the parallel grid >= 2 steps when useful.
    if Rp // tm == 1 and Dp // tn == 1 and tm >= 32 and R > tm // 2:
        tm //= 2
        Rp = _round_up(R, tm)
    return tm, tn, Rp


# --------------------------------- forward ----------------------------------

def swiglu(x, params, *, tn=512):
    """SwiGLU forward with pre-packed params: (fc1(x)*sigmoid(fc1(x))) * sigmoid(fc2(x))."""
    D = params["d"]
    w1, w2, b1, b2 = params["w1"], params["w2"], params["b1"], params["b2"]
    Dp = w1.shape[0]

    orig_shape = x.shape
    assert orig_shape[-1] == D, (orig_shape, D)
    R = 1
    for s in orig_shape[:-1]:
        R *= s

    cdt = w1.dtype                      # compute dtype (e.g. bf16 or f32)
    out_dtype = x.dtype                 # write back in the input dtype
    in_isz = jnp.dtype(cdt).itemsize
    out_isz = jnp.dtype(out_dtype).itemsize

    x2 = x.reshape(R, D).astype(cdt)
    if Dp != D:
        x2 = jnp.pad(x2, ((0, 0), (0, Dp - D)))

    tm, tn, Rp = _pick_tiles(R, Dp, in_isz, out_isz, tn_hint=tn)
    if Rp != R:
        x2 = jnp.pad(x2, ((0, Rp - R), (0, 0)))

    grid = (Rp // tm, Dp // tn)

    fp = _tile_footprint_bytes(tm, tn, Dp, in_isz, out_isz)
    vmem_limit = min(max(int(1.5 * fp) + (4 << 20), 16 << 20), 64 << 20)

    cost = pl.CostEstimate(
        flops=4 * Rp * Dp * Dp,                       # two [Rp,Dp]x[Dp,Dp] matmuls
        transcendentals=2 * Rp * Dp,                  # two sigmoids
        bytes_accessed=(Rp * Dp * in_isz              # x
                        + 2 * Dp * Dp * in_isz        # W1, W2
                        + 2 * Dp * in_isz             # b1, b2
                        + Rp * Dp * out_isz),         # out
    )

    out = pl.pallas_call(
        _swiglu_kernel,
        out_shape=jax.ShapeDtypeStruct((Rp, Dp), out_dtype),
        grid_spec=pltpu.PrefetchScalarGridSpec(
            num_scalar_prefetch=0,
            grid=grid,
            in_specs=[
                pl.BlockSpec((tm, Dp), lambda i, j: (i, 0)),   # x row tile (resident across j)
                pl.BlockSpec((Dp, tn), lambda i, j: (0, j)),   # W1 column tile (streams)
                pl.BlockSpec((Dp, tn), lambda i, j: (0, j)),   # W2 column tile (streams)
                pl.BlockSpec((1, tn), lambda i, j: (0, j)),    # b1 tile
                pl.BlockSpec((1, tn), lambda i, j: (0, j)),    # b2 tile
            ],
            out_specs=pl.BlockSpec((tm, tn), lambda i, j: (i, j)),
        ),
        compiler_params=pltpu.CompilerParams(
            dimension_semantics=("parallel", "parallel"),
            vmem_limit_bytes=vmem_limit,
        ),
        cost_estimate=cost,
    )(x2, w1, w2, b1, b2)

    return out[:R, :D].reshape(orig_shape)


# ------------------------ parameters (deterministic) ------------------------

def init_swiglu(key, d):
    """Match torch.nn.Linear default init (uniform(-1/sqrt(d), 1/sqrt(d)))."""
    k1, k2, k3, k4 = jax.random.split(key, 4)
    lim = 1.0 / math.sqrt(d)
    w1 = jax.random.uniform(k1, (d, d), jnp.float32, -lim, lim)
    b1 = jax.random.uniform(k2, (d,), jnp.float32, -lim, lim)
    w2 = jax.random.uniform(k3, (d, d), jnp.float32, -lim, lim)
    b2 = jax.random.uniform(k4, (d,), jnp.float32, -lim, lim)
    return w1, b1, w2, b2


# --------------------------------- test -------------------------------------

if __name__ == "__main__":
    key = jax.random.PRNGKey(0)
    kx, kp = jax.random.split(key)

    B, S, D = 2, 8, 64
    x = jax.random.normal(kx, (B, S, D), jnp.float32)
    w1, b1, w2, b2 = init_swiglu(kp, D)

    # Pure-JAX reference (torch semantics: fc1(x)*sigmoid(fc1(x))*sigmoid(fc2(x))).
    h1 = x @ w1 + b1
    h2 = x @ w2 + b2
    ref = (h1 * jax.nn.sigmoid(h1)) * jax.nn.sigmoid(h2)

    # f32 path (tight tolerance).
    params_f32 = pack_swiglu_params(w1, b1, w2, b2)
    y = jax.block_until_ready(swiglu(x, params_f32))
    assert y.shape == ref.shape, (y.shape, ref.shape)
    assert bool(jnp.all(jnp.isfinite(y)))
    err = float(jnp.max(jnp.abs(y - ref)))
    assert jnp.allclose(y, ref, atol=1e-5, rtol=1e-5), err

    # bf16 path (bf16 MXU operands, f32 accumulation, bf16 writeback).
    params_bf16 = pack_swiglu_params(w1, b1, w2, b2, compute_dtype=jnp.bfloat16)
    y_bf16 = jax.block_until_ready(swiglu(x.astype(jnp.bfloat16), params_bf16))
    assert y_bf16.dtype == jnp.bfloat16
    assert bool(jnp.all(jnp.isfinite(y_bf16.astype(jnp.float32))))
    err_bf16 = float(jnp.max(jnp.abs(y_bf16.astype(jnp.float32) - ref)))
    assert jnp.allclose(y_bf16.astype(jnp.float32), ref, atol=3e-2, rtol=3e-2), err_bf16

    print("KERNEL_OK")
</pallas_src>

<mosaic_0001>
module attributes {stable_mosaic.version = 11 : i64} {
  func.func @_swiglu_kernel(%arg0: i32, %arg1: i32, %arg2: memref<16x128xf32, #tpu.memory_space<vmem>>, %arg3: memref<128x128xf32, #tpu.memory_space<vmem>>, %arg4: memref<128x128xf32, #tpu.memory_space<vmem>>, %arg5: memref<1x128xf32, #tpu.memory_space<vmem>>, %arg6: memref<1x128xf32, #tpu.memory_space<vmem>>, %arg7: memref<16x128xf32, #tpu.memory_space<vmem>>) attributes {dimension_semantics = [#tpu.dimension_semantics<parallel>, #tpu.dimension_semantics<parallel>], iteration_bounds = array<i64: 1, 1>, scalar_prefetch = 0 : i64, scratch_operands = 0 : i64, tpu.core_type = #tpu.core_type<tc>, window_params = [{transform_indices = @transform_0, window_bounds = array<i64: 16, 128>}, {transform_indices = @transform_1, window_bounds = array<i64: 128, 128>}, {transform_indices = @transform_2, window_bounds = array<i64: 128, 128>}, {transform_indices = @transform_3, window_bounds = array<i64: 1, 128>}, {transform_indices = @transform_4, window_bounds = array<i64: 1, 128>}, {transform_indices = @transform_5, window_bounds = array<i64: 16, 128>}]} {
    %c0 = arith.constant 0 : index
    %c0_0 = arith.constant 0 : index
    %0 = vector.load %arg2[%c0, %c0_0] : memref<16x128xf32, #tpu.memory_space<vmem>>, vector<16x128xf32>
    %c0_1 = arith.constant 0 : index
    %c0_2 = arith.constant 0 : index
    %1 = vector.load %arg3[%c0_1, %c0_2] : memref<128x128xf32, #tpu.memory_space<vmem>>, vector<128x128xf32>
    %cst = arith.constant dense<0.000000e+00> : vector<16x128xf32>
    %2 = tpu.matmul %0, %1, %cst {dimension_numbers = #tpu.dot_dimension_numbers<[1], [0], [0], [1], [0, 0, 1, 1], [], []>} : vector<16x128xf32>, vector<128x128xf32>, vector<16x128xf32> -> vector<16x128xf32>
    %c0_3 = arith.constant 0 : index
    %c0_4 = arith.constant 0 : index
    %3 = vector.load %arg5[%c0_3, %c0_4] : memref<1x128xf32, #tpu.memory_space<vmem>>, vector<1x128xf32>
    %4 = vector.broadcast %3 : vector<1x128xf32> to vector<16x128xf32>
    %5 = arith.addf %2, %4 : vector<16x128xf32>
    %c0_5 = arith.constant 0 : index
    %c0_6 = arith.constant 0 : index
    %6 = vector.load %arg4[%c0_5, %c0_6] : memref<128x128xf32, #tpu.memory_space<vmem>>, vector<128x128xf32>
    %cst_7 = arith.constant dense<0.000000e+00> : vector<16x128xf32>
    %7 = tpu.matmul %0, %6, %cst_7 {dimension_numbers = #tpu.dot_dimension_numbers<[1], [0], [0], [1], [0, 0, 1, 1], [], []>} : vector<16x128xf32>, vector<128x128xf32>, vector<16x128xf32> -> vector<16x128xf32>
    %c0_8 = arith.constant 0 : index
    %c0_9 = arith.constant 0 : index
    %8 = vector.load %arg6[%c0_8, %c0_9] : memref<1x128xf32, #tpu.memory_space<vmem>>, vector<1x128xf32>
    %9 = vector.broadcast %8 : vector<1x128xf32> to vector<16x128xf32>
    %10 = arith.addf %7, %9 : vector<16x128xf32>
    %11 = arith.negf %5 : vector<16x128xf32>
    %12 = math.exp %11 : vector<16x128xf32>
    %cst_10 = arith.constant 1.000000e+00 : f32
    %13 = vector.broadcast %cst_10 : f32 to vector<16x128xf32>
    %14 = arith.addf %13, %12 : vector<16x128xf32>
    %15 = arith.divf %13, %14 : vector<16x128xf32>
    %16 = arith.mulf %5, %15 : vector<16x128xf32>
    %17 = arith.negf %10 : vector<16x128xf32>
    %18 = math.exp %17 : vector<16x128xf32>
    %cst_11 = arith.constant 1.000000e+00 : f32
    %19 = vector.broadcast %cst_11 : f32 to vector<16x128xf32>
    %20 = arith.addf %19, %18 : vector<16x128xf32>
    %21 = arith.divf %19, %20 : vector<16x128xf32>
    %22 = arith.mulf %16, %21 : vector<16x128xf32>
    %c0_12 = arith.constant 0 : index
    %c0_13 = arith.constant 0 : index
    %23 = vector.load %arg7[%c0_12, %c0_13] : memref<16x128xf32, #tpu.memory_space<vmem>>, vector<16x128xf32>
    tpu.vector_store %arg7[%c0_12, %c0_13], %22 {strides = array<i32>} : memref<16x128xf32, #tpu.memory_space<vmem>>, vector<16x128xf32>,
    return
  }
  func.func @transform_0(%arg0: i32, %arg1: i32) -> (i32, i32) {
    %c0_i32 = arith.constant 0 : i32
    %c0_i32_0 = arith.constant 0 : i32
    return %arg0, %c0_i32 : i32, i32
  }
  func.func @transform_1(%arg0: i32, %arg1: i32) -> (i32, i32) {
    %c0_i32 = arith.constant 0 : i32
    %c0_i32_0 = arith.constant 0 : i32
    return %c0_i32, %arg1 : i32, i32
  }
  func.func @transform_2(%arg0: i32, %arg1: i32) -> (i32, i32) {
    %c0_i32 = arith.constant 0 : i32
    %c0_i32_0 = arith.constant 0 : i32
    return %c0_i32, %arg1 : i32, i32
  }
  func.func @transform_3(%arg0: i32, %arg1: i32) -> (i32, i32) {
    %c0_i32 = arith.constant 0 : i32
    %c0_i32_0 = arith.constant 0 : i32
    return %c0_i32, %arg1 : i32, i32
  }
  func.func @transform_4(%arg0: i32, %arg1: i32) -> (i32, i32) {
    %c0_i32 = arith.constant 0 : i32
    %c0_i32_0 = arith.constant 0 : i32
    return %c0_i32, %arg1 : i32, i32
  }
  func.func @transform_5(%arg0: i32, %arg1: i32) -> (i32, i32) {
    %c0_i32 = arith.constant 0 : i32
    return %arg0, %arg1 : i32, i32
  }
}

</mosaic_0001>

<llo_original>
// kernel: tpu_custom_call.1
$region0: #{tpu_custom_call.1}
  #allocation0 [shape = 'u32[]', space=smem, size = 0x4, offset = 0x4, fixed_abs, tag = 'smem constant byte address 0x4 - core index']
  #allocation1 [shape = 'u32[144,128]{1,0:T(1,128)}', space=vmem, size = 0x12000, scoped, tag = 'internal scratch']
  %s0 = inlined_call_operand.hbm [shape: f32[16,128], index: 0, kind: input, shape index: {}]
  %s1 = inlined_call_operand.hbm [shape: f32[128,128], index: 1, kind: input, shape index: {}]
  %s2 = inlined_call_operand.hbm [shape: f32[128,128], index: 2, kind: input, shape index: {}]
  %s3 = inlined_call_operand.vmem [shape: f32[1,128], index: 3, kind: input, shape index: {}]
  %s4 = inlined_call_operand.vmem [shape: f32[1,128], index: 4, kind: input, shape index: {}]
  %s5 = inlined_call_operand.hbm [shape: f32[16,128], index: 5, kind: output, shape index: {}]
  %s6 = sld [smem:[#allocation0]]
  $region42: #{tpu_custom_call.1} parent=0
    _
  %s8 = ssub.s32 1, %s6
  %s9 = scalar_select 0, %s8, %s6
  $region1: #{tpu_custom_call.1} parent=0
    #allocation2 [shape = 'u8[8192]{0}', space=vmem, size = 0x2000, scoped, tag = 'input window, operand 0, single buffered']
    #allocation3 [shape = 's32[1]{0}', space=sflag, size = 0x4, scoped, tag = 'scoped memory for tpu_custom_call.1']
    #allocation4 [shape = 's32[1]{0}', space=sflag, size = 0x4, scoped, tag = 'scoped memory for tpu_custom_call.1']
    #allocation5 [shape = 'u8[65536]{0}', space=vmem, size = 0x10000, scoped, tag = 'input window, operand 1, single buffered']
    #allocation6 [shape = 's32[1]{0}', space=sflag, size = 0x4, scoped, tag = 'scoped memory for tpu_custom_call.1']
    #allocation7 [shape = 'u8[65536]{0}', space=vmem, size = 0x10000, scoped, tag = 'input window, operand 2, single buffered']
    #allocation8 [shape = 'u8[8192]{0}', space=vmem, size = 0x2000, scoped, tag = 'output window, operand 0, single buffered']
    %10 = vsyncpa [#allocation3], 0
    %11 = vsyncpa [#allocation6], 0
    %12 = vsyncpa [#allocation4], 0
    // Predicated region
    $region2: #{tpu_custom_call.1} parent=1 // pred_check
      _
    $region3: #{tpu_custom_call.1} parent=1 // pred_check_branch
      %14 = sbr.rel (0) target = $region5
    $region4: #{tpu_custom_call.1} parent=1 // pred_region
      %s16 = ssub.s32 256, 256
      %17 = vsyncadd [#allocation3], %s16
      %s18 = sshll.u32 [#allocation2], 4
      %s19 = int_to_ptr.vmem [resolvable:$true] %s18
      %24 = dma.hbm_to_vmem [thread:$0]  %s0, 256, %s19, [#allocation3], 128, 128, 8
    $region5: #{tpu_custom_call.1} parent=1 // pred_fallthru
      _
    // Predicated region
    $region6: #{tpu_custom_call.1} parent=1 // pred_check
      _
    $region7: #{tpu_custom_call.1} parent=1 // pred_check_branch
      %26 = sbr.rel (0) target = $region9
    $region8: #{tpu_custom_call.1} parent=1 // pred_region
      %s28 = ssub.s32 2048, 2048
      %29 = vsyncadd [#allocation6], %s28
      %s30 = sshll.u32 [#allocation5], 4
      %s31 = int_to_ptr.vmem [resolvable:$true] %s30
      %36 = dma.hbm_to_vmem [thread:$0]  %s1, 2048, %s31, [#allocation6], 128, 128, 8
    $region9: #{tpu_custom_call.1} parent=1 // pred_fallthru
      _
    // Predicated region
    $region10: #{tpu_custom_call.1} parent=1 // pred_check
      _
    $region11: #{tpu_custom_call.1} parent=1 // pred_check_branch
      %38 = sbr.rel (0) target = $region13
    $region12: #{tpu_custom_call.1} parent=1 // pred_region
      %s40 = ssub.s32 2048, 2048
      %41 = vsyncadd [#allocation6], %s40
      %s42 = sshll.u32 [#allocation7], 4
      %s43 = int_to_ptr.vmem [resolvable:$true] %s42
      %48 = dma.hbm_to_vmem [thread:$0]  %s2, 2048, %s43, [#allocation6], 128, 128, 8
    $region13: #{tpu_custom_call.1} parent=1 // pred_fallthru
      _
    // Predicated region
    $region14: #{tpu_custom_call.1} parent=1 // pred_check
      _
    $region15: #{tpu_custom_call.1} parent=1 // pred_check_branch
      %50 = sbr.rel (0) target = $region17
    $region16: #{tpu_custom_call.1} parent=1 // pred_region
      _
    $region17: #{tpu_custom_call.1} parent=1 // pred_fallthru
      _
    // Predicated region
    $region18: #{tpu_custom_call.1} parent=1 // pred_check
      _
    $region19: #{tpu_custom_call.1} parent=1 // pred_check_branch
      %52 = sbr.rel (0) target = $region21
    $region20: #{tpu_custom_call.1} parent=1 // pred_region
      _
    $region21: #{tpu_custom_call.1} parent=1 // pred_fallthru
      _
    // Predicated region
    $region22: #{tpu_custom_call.1} parent=1 // pred_check
      _
    $region23: #{tpu_custom_call.1} parent=1 // pred_check_branch
      %54 = sbr.rel (0) target = $region25
    $region24: #{tpu_custom_call.1} parent=1 // pred_region
      %55 = dma.done [#allocation3], 256
    $region25: #{tpu_custom_call.1} parent=1 // pred_fallthru
      _
    // Predicated region
    $region26: #{tpu_custom_call.1} parent=1 // pred_check
      _
    $region27: #{tpu_custom_call.1} parent=1 // pred_check_branch
      %57 = sbr.rel (0) target = $region29
    $region28: #{tpu_custom_call.1} parent=1 // pred_region
      %58 = dma.done [#allocation6], 2048
    $region29: #{tpu_custom_call.1} parent=1 // pred_fallthru
      _
    // Predicated region
    $region30: #{tpu_custom_call.1} parent=1 // pred_check
      _
    $region31: #{tpu_custom_call.1} parent=1 // pred_check_branch
      %60 = sbr.rel (0) target = $region33
    $region32: #{tpu_custom_call.1} parent=1 // pred_region
      %61 = dma.done [#allocation6], 2048
    $region33: #{tpu_custom_call.1} parent=1 // pred_fallthru
      _
    %v62 = vld [vmem:[#allocation2] sm:$0xff]
    %v63 = vld [vmem:[#allocation2 + $0x8] sm:$0xff]
    %v64 = vld [vmem:[#allocation5] sm:$0xff]
    %v65 = vld [vmem:[#allocation5 + $0x8] sm:$0xff]
    %v66 = vld [vmem:[#allocation5 + $0x10] sm:$0xff]
    %v67 = vld [vmem:[#allocation5 + $0x18] sm:$0xff]
    %v68 = vld [vmem:[#allocation5 + $0x20] sm:$0xff]
    %v69 = vld [vmem:[#allocation5 + $0x28] sm:$0xff]
    %v70 = vld [vmem:[#allocation5 + $0x30] sm:$0xff]
    %v71 = vld [vmem:[#allocation5 + $0x38] sm:$0xff]
    %v72 = vld [vmem:[#allocation5 + $0x40] sm:$0xff]
    %v73 = vld [vmem:[#allocation5 + $0x48] sm:$0xff]
    %v74 = vld [vmem:[#allocation5 + $0x50] sm:$0xff]
    %v75 = vld [vmem:[#allocation5 + $0x58] sm:$0xff]
    %v76 = vld [vmem:[#allocation5 + $0x60] sm:$0xff]
    %v77 = vld [vmem:[#allocation5 + $0x68] sm:$0xff]
    %v78 = vld [vmem:[#allocation5 + $0x70] sm:$0xff]
    %v79 = vld [vmem:[#allocation5 + $0x78] sm:$0xff]
    %v80 = vld [vmem:[%s3] sm:$0x1]
    %v82 = vlaneseq
    %v83 = vshrl.u32 %v82, 7
    %v84 = vsub.s32 0, %v83
    %v85 = vrot.slane %v80, %v84
    %87 = vmatprep.subr.mxu0 0.0
    %88 = vmatpush1.msra.mxu0 %v64
    %89 = vmatprep.subr.mxu0 0.0
    %90 = vmatpush1.msra.mxu0 %v65
    %91 = vmatprep.subr.mxu0 0.0
    %92 = vmatpush1.msra.mxu0 %v66
    %93 = vmatprep.subr.mxu0 0.0
    %94 = vmatpush1.msra.mxu0 %v67
    %95 = vmatprep.subr.mxu0 0.0
    %96 = vmatpush1.msra.mxu0 %v68
    %97 = vmatprep.subr.mxu0 0.0
    %98 = vmatpush1.msra.mxu0 %v69
    %99 = vmatprep.subr.mxu0 0.0
    %100 = vmatpush1.msra.mxu0 %v70
    %101 = vmatprep.subr.mxu0 0.0
    %102 = vmatpush1.msra.mxu0 %v71
    %103 = vmatprep.subr.mxu0 0.0
    %104 = vmatpush1.msra.mxu0 %v72
    %105 = vmatprep.subr.mxu0 0.0
    %106 = vmatpush1.msra.mxu0 %v73
    %107 = vmatprep.subr.mxu0 0.0
    %108 = vmatpush1.msra.mxu0 %v74
    %109 = vmatprep.subr.mxu0 0.0
    %110 = vmatpush1.msra.mxu0 %v75
    %111 = vmatprep.subr.mxu0 0.0
    %112 = vmatpush1.msra.mxu0 %v76
    %113 = vmatprep.subr.mxu0 0.0
    %114 = vmatpush1.msra.mxu0 %v77
    %115 = vmatprep.subr.mxu0 0.0
    %116 = vmatpush1.msra.mxu0 %v78
    %117 = vmatprep.subr.mxu0 0.0
    %118 = vmatpush1.msra.mxu0 %v79
    %119 = vmatprep.subr.mxu0 0.0
    %120 = vmatpush1.msra.mxu0 0.0
    %121 = vmatprep.subr.mxu0 0.0
    %122 = vmatpush1.msra.mxu0 0.0
    %123 = vmatprep.subr.mxu0 0.0
    %124 = vmatpush1.msra.mxu0 0.0
    %125 = vmatprep.subr.mxu0 0.0
    %126 = vmatpush1.msra.mxu0 0.0
    %127 = vmatprep.subr.mxu0 0.0
    %128 = vmatpush1.msra.mxu0 0.0
    %129 = vmatprep.subr.mxu0 0.0
    %130 = vmatpush1.msra.mxu0 0.0
    %131 = vmatprep.subr.mxu0 0.0
    %132 = vmatpush1.msra.mxu0 0.0
    %133 = vmatprep.subr.mxu0 0.0
    %134 = vmatpush1.msra.mxu0 0.0
    %135 = vmatprep.subr.mxu0 0.0
    %136 = vmatpush1.msra.mxu0 0.0
    %137 = vmatprep.subr.mxu0 0.0
    %138 = vmatpush1.msra.mxu0 0.0
    %139 = vmatprep.subr.mxu0 0.0
    %140 = vmatpush1.msra.mxu0 0.0
    %141 = vmatprep.subr.mxu0 0.0
    %142 = vmatpush1.msra.mxu0 0.0
    %143 = vmatprep.subr.mxu0 0.0
    %144 = vmatpush1.msra.mxu0 0.0
    %145 = vmatprep.subr.mxu0 0.0
    %146 = vmatpush1.msra.mxu0 0.0
    %147 = vmatprep.subr.mxu0 0.0
    %148 = vmatpush1.msra.mxu0 0.0
    %149 = vmatprep.subr.mxu0 0.0
    %150 = vmatpush1.msra.mxu0 0.0
    %151 = vmatprep.mubr.f32.mxu0 0.0
    %152 = vmatmul.mubr.f32.gmra.mrb[0].mxu0 %v62
    %v153 = vpop.f32.mrb[0].mxu0
    %v154 = vadd.f32 %v85, %v153
    %v155 = vpop.f32.mrb[0].mxu0
    %156 = vmatprep.mubr.f32.mxu0 0.0
    %157 = vmatmul.mubr.f32.gmra.mrb[0].mxu0 %v63
    %v158 = vpop.f32.mrb[0].mxu0
    %v159 = vadd.f32 %v85, %v158
    %v160 = vpop.f32.mrb[0].mxu0
    %161 = vdwg.mxu0
    %v162 = vld [vmem:[#allocation7] sm:$0xff]
    %v163 = vld [vmem:[#allocation7 + $0x8] sm:$0xff]
    %v164 = vld [vmem:[#allocation7 + $0x10] sm:$0xff]
    %v165 = vld [vmem:[#allocation7 + $0x18] sm:$0xff]
    %v166 = vld [vmem:[#allocation7 + $0x20] sm:$0xff]
    %v167 = vld [vmem:[#allocation7 + $0x28] sm:$0xff]
    %v168 = vld [vmem:[#allocation7 + $0x30] sm:$0xff]
    %v169 = vld [vmem:[#allocation7 + $0x38] sm:$0xff]
    %v170 = vld [vmem:[#allocation7 + $0x40] sm:$0xff]
    %v171 = vld [vmem:[#allocation7 + $0x48] sm:$0xff]
    %v172 = vld [vmem:[#allocation7 + $0x50] sm:$0xff]
    %v173 = vld [vmem:[#allocation7 + $0x58] sm:$0xff]
    %v174 = vld [vmem:[#allocation7 + $0x60] sm:$0xff]
    %v175 = vld [vmem:[#allocation7 + $0x68] sm:$0xff]
    %v176 = vld [vmem:[#allocation7 + $0x70] sm:$0xff]
    %v177 = vld [vmem:[#allocation7 + $0x78] sm:$0xff]
    %v178 = vld [vmem:[%s4] sm:$0x1]
    %v180 = vlaneseq
    %v181 = vshrl.u32 %v180, 7
    %v182 = vsub.s32 0, %v181
    %v183 = vrot.slane %v178, %v182
    %185 = vmatprep.subr.mxu0 0.0
    %186 = vmatpush1.msra.mxu0 %v162
    %187 = vmatprep.subr.mxu0 0.0
    %188 = vmatpush1.msra.mxu0 %v163
    %189 = vmatprep.subr.mxu0 0.0
    %190 = vmatpush1.msra.mxu0 %v164
    %191 = vmatprep.subr.mxu0 0.0
    %192 = vmatpush1.msra.mxu0 %v165
    %193 = vmatprep.subr.mxu0 0.0
    %194 = vmatpush1.msra.mxu0 %v166
    %195 = vmatprep.subr.mxu0 0.0
    %196 = vmatpush1.msra.mxu0 %v167
    %197 = vmatprep.subr.mxu0 0.0
    %198 = vmatpush1.msra.mxu0 %v168
    %199 = vmatprep.subr.mxu0 0.0
    %200 = vmatpush1.msra.mxu0 %v169
    %201 = vmatprep.subr.mxu0 0.0
    %202 = vmatpush1.msra.mxu0 %v170
    %203 = vmatprep.subr.mxu0 0.0
    %204 = vmatpush1.msra.mxu0 %v171
    %205 = vmatprep.subr.mxu0 0.0
    %206 = vmatpush1.msra.mxu0 %v172
    %207 = vmatprep.subr.mxu0 0.0
    %208 = vmatpush1.msra.mxu0 %v173
    %209 = vmatprep.subr.mxu0 0.0
    %210 = vmatpush1.msra.mxu0 %v174
    %211 = vmatprep.subr.mxu0 0.0
    %212 = vmatpush1.msra.mxu0 %v175
    %213 = vmatprep.subr.mxu0 0.0
    %214 = vmatpush1.msra.mxu0 %v176
    %215 = vmatprep.subr.mxu0 0.0
    %216 = vmatpush1.msra.mxu0 %v177
    %217 = vmatprep.subr.mxu0 0.0
    %218 = vmatpush1.msra.mxu0 0.0
    %219 = vmatprep.subr.mxu0 0.0
    %220 = vmatpush1.msra.mxu0 0.0
    %221 = vmatprep.subr.mxu0 0.0
    %222 = vmatpush1.msra.mxu0 0.0
    %223 = vmatprep.subr.mxu0 0.0
    %224 = vmatpush1.msra.mxu0 0.0
    %225 = vmatprep.subr.mxu0 0.0
    %226 = vmatpush1.msra.mxu0 0.0
    %227 = vmatprep.subr.mxu0 0.0
    %228 = vmatpush1.msra.mxu0 0.0
    %229 = vmatprep.subr.mxu0 0.0
    %230 = vmatpush1.msra.mxu0 0.0
    %231 = vmatprep.subr.mxu0 0.0
    %232 = vmatpush1.msra.mxu0 0.0
    %233 = vmatprep.subr.mxu0 0.0
    %234 = vmatpush1.msra.mxu0 0.0
    %235 = vmatprep.subr.mxu0 0.0
    %236 = vmatpush1.msra.mxu0 0.0
    %237 = vmatprep.subr.mxu0 0.0
    %238 = vmatpush1.msra.mxu0 0.0
    %239 = vmatprep.subr.mxu0 0.0
    %240 = vmatpush1.msra.mxu0 0.0
    %241 = vmatprep.subr.mxu0 0.0
    %242 = vmatpush1.msra.mxu0 0.0
    %243 = vmatprep.subr.mxu0 0.0
    %244 = vmatpush1.msra.mxu0 0.0
    %245 = vmatprep.subr.mxu0 0.0
    %246 = vmatpush1.msra.mxu0 0.0
    %247 = vmatprep.subr.mxu0 0.0
    %248 = vmatpush1.msra.mxu0 0.0
    %249 = vmatprep.mubr.f32.mxu0 0.0
    %250 = vmatmul.mubr.f32.gmra.mrb[0].mxu0 %v62
    %v251 = vpop.f32.mrb[0].mxu0
    %v252 = vadd.f32 %v183, %v251
    %v253 = vpop.f32.mrb[0].mxu0
    %254 = vmatprep.mubr.f32.mxu0 0.0
    %255 = vmatmul.mubr.f32.gmra.mrb[0].mxu0 %v63
    %v256 = vpop.f32.mrb[0].mxu0
    %v257 = vadd.f32 %v183, %v256
    %v258 = vpop.f32.mrb[0].mxu0
    %259 = vdwg.mxu0
    %v260 = vxor.u32 %v154, 2147483648
    %v261 = vxor.u32 %v159, 2147483648
    %v262 = vmul.f32 %v260, 1.442695
    %v263 = vpow.pop %v262
    %v264 = vmul.f32 %v261, 1.442695
    %v265 = vpow.pop %v264
    %v266 = vadd.f32 %v263, 1.0
    %v267 = vadd.f32 %v265, 1.0
    %v268 = vrcp.pop %v266
    %v269 = vmul.f32 1.0, %v268
    %v270 = vrcp.pop %v267
    %v271 = vmul.f32 1.0, %v270
    %v272 = vmul.f32 %v154, %v269
    %v273 = vmul.f32 %v159, %v271
    %v274 = vxor.u32 %v252, 2147483648
    %v275 = vxor.u32 %v257, 2147483648
    %v276 = vmul.f32 %v274, 1.442695
    %v277 = vpow.pop %v276
    %v278 = vmul.f32 %v275, 1.442695
    %v279 = vpow.pop %v278
    %v280 = vadd.f32 %v277, 1.0
    %v281 = vadd.f32 %v279, 1.0
    %v282 = vrcp.pop %v280
    %v283 = vmul.f32 1.0, %v282
    %v284 = vrcp.pop %v281
    %v285 = vmul.f32 1.0, %v284
    %v286 = vmul.f32 %v272, %v283
    %v287 = vmul.f32 %v273, %v285
    %288 = vst [vmem:[#allocation8] sm:$0xff] %v286
    %289 = vst [vmem:[#allocation8 + $0x8] sm:$0xff] %v287
    // Predicated region
    $region34: #{tpu_custom_call.1} parent=1 // pred_check
      _
    $region35: #{tpu_custom_call.1} parent=1 // pred_check_branch
      %291 = sbr.rel (0) target = $region37
    $region36: #{tpu_custom_call.1} parent=1 // pred_region
      %s293 = ssub.s32 256, 256
      %294 = vsyncadd [#allocation4], %s293
      %s295 = sshll.u32 [#allocation8], 4
      %s296 = int_to_ptr.vmem [resolvable:$true] %s295
      %301 = dma.vmem_to_hbm [thread:$0]  %s296, 256, %s5, [#allocation4], 128, 128, 8
    $region37: #{tpu_custom_call.1} parent=1 // pred_fallthru
      _
    // Predicated region
    $region38: #{tpu_custom_call.1} parent=1 // pred_check
      _
    $region39: #{tpu_custom_call.1} parent=1 // pred_check_branch
      %303 = sbr.rel (0) target = $region41
    $region40: #{tpu_custom_call.1} parent=1 // pred_region
      %304 = dma.done [#allocation4], 256
    $region41: #{tpu_custom_call.1} parent=1 // pred_fallthru
      _
    %305 = vsyncpa [#allocation3], 1
    %306 = vsyncpa [#allocation6], 1
    %307 = vsyncpa [#allocation4], 1

</llo_original>
